<compile_context>
chip_gen: v5e
topology: v5e:2x2
jax: 0.10.0
libtpu: 0.0.40
codegen_flags: <defaults>
</compile_context>

<pallas_src>
import functools

import jax
import jax.numpy as jnp
from jax.experimental import pallas as pl
from jax.experimental.pallas import tpu as pltpu

SMOOTH = 1e-5
LANES = 128
TILE_MAX = 16384  # lanes per grid step; ~256 KiB/class-row-block footprint max


def _dice_partials_kernel(score_ref, target_ref, out_ref,
                          acc_i_ref, acc_y_ref, acc_z_ref,
                          *, hw, tile, ragged):
    """score_ref:  (C, tile) f32   scores for one batch element, one H*W tile
       target_ref: (1, tile) i32   class labels for the same tile
       out_ref:    (C, 3)    f32   per-batch [intersect, y_sum, z_sum]
       acc_*_ref:  (C, 128)  f32   per-lane partial-sum accumulators (scratch)
    """
    C = score_ref.shape[0]
    t = pl.program_id(1)

    @pl.when(t == 0)
    def _init():
        acc_i_ref[...] = jnp.zeros_like(acc_i_ref)
        acc_y_ref[...] = jnp.zeros_like(acc_y_ref)
        acc_z_ref[...] = jnp.zeros_like(acc_z_ref)

    score = score_ref[...]                  # (C, tile) f32
    tgt = target_ref[...]                   # (1, tile) i32

    if ragged:
        # Mask the out-of-range tail of the last (partial) tile: padded region
        # of a boundary block is undefined, so zero scores and use label -1.
        col = t * tile + jax.lax.broadcasted_iota(jnp.int32, (1, tile), 1)
        valid = col < hw
        score = jnp.where(valid, score, 0.0)
        tgt = jnp.where(valid, tgt, -1)

    # On-the-fly one-hot: onehot[c, m] = (target[m] == c)  (exact int compare)
    class_ids = jax.lax.broadcasted_iota(jnp.int32, (C, tile), 0)
    onehot = tgt == class_ids               # (C, tile) bool via broadcast

    inter = jnp.where(onehot, score, 0.0)   # score * onehot without a multiply
    ymat = jnp.where(onehot, 1.0, 0.0)      # onehot*onehot == onehot
    zmat = score * score

    # Fold the tile down to per-lane partials with pure vreg adds (no XLU).
    k = tile // LANES
    pi = inter[:, 0:LANES]
    py = ymat[:, 0:LANES]
    pz = zmat[:, 0:LANES]
    for j in range(1, k):
        sl = slice(j * LANES, (j + 1) * LANES)
        pi = pi + inter[:, sl]
        py = py + ymat[:, sl]
        pz = pz + zmat[:, sl]

    acc_i_ref[...] += pi
    acc_y_ref[...] += py
    acc_z_ref[...] += pz

    # Single cross-lane reduction, once per batch element, at the last tile.
    @pl.when(t == pl.num_programs(1) - 1)
    def _finalize():
        out_ref[:, 0:1] = jnp.sum(acc_i_ref[...], axis=-1, keepdims=True)
        out_ref[:, 1:2] = jnp.sum(acc_y_ref[...], axis=-1, keepdims=True)
        out_ref[:, 2:3] = jnp.sum(acc_z_ref[...], axis=-1, keepdims=True)


def dice_loss(inputs, target, n_classes, weight=None, softmax=False):
    """Pallas implementation of DiceLoss.forward.

    inputs: (N, C, H, W) scores; target: (N, H, W) integer labels.
    Returns a scalar float32 loss (mean of per-class weighted dice losses).
    """
    N, C, H, W = inputs.shape
    assert C == n_classes, f"inputs channels {C} != n_classes {n_classes}"

    if softmax:
        # elementwise glue outside the kernel (default path is softmax=False)
        inputs = jax.nn.softmax(inputs, axis=1)
    if weight is None:
        weight = [1.0] * n_classes

    HW = H * W
    score = inputs.reshape(N, C, HW).astype(jnp.float32)   # contiguous reshape
    tgt = target.reshape(N, 1, HW).astype(jnp.int32)

    tile = min(TILE_MAX, pl.cdiv(HW, LANES) * LANES)
    num_tiles = pl.cdiv(HW, tile)
    ragged = (HW % tile) != 0

    kernel = functools.partial(_dice_partials_kernel,
                               hw=HW, tile=tile, ragged=ragged)

    partials = pl.pallas_call(
        kernel,
        out_shape=jax.ShapeDtypeStruct((N, C, 3), jnp.float32),
        grid=(N, num_tiles),
        in_specs=[
            pl.BlockSpec((None, C, tile), lambda n, t: (n, 0, t)),   # scores
            pl.BlockSpec((None, 1, tile), lambda n, t: (n, 0, t)),   # labels
        ],
        out_specs=pl.BlockSpec((None, C, 3), lambda n, t: (n, 0, 0)),
        scratch_shapes=[
            pltpu.VMEM((C, LANES), jnp.float32),   # intersect lane-partials
            pltpu.VMEM((C, LANES), jnp.float32),   # y_sum lane-partials
            pltpu.VMEM((C, LANES), jnp.float32),   # z_sum lane-partials
        ],
        compiler_params=pltpu.CompilerParams(
            dimension_semantics=("parallel", "arbitrary"),
        ),
    )(score, tgt)

    # Tiny finalize in plain JAX: combine per-batch partials, dice, weight, mean.
    totals = jnp.sum(partials, axis=0)          # (C, 3)
    intersect = totals[:, 0]
    y_sum = totals[:, 1]
    z_sum = totals[:, 2]
    dice = 1.0 - (2.0 * intersect + SMOOTH) / (z_sum + y_sum + SMOOTH)
    w = jnp.asarray(weight, jnp.float32)
    return (jnp.sum(dice * w) / n_classes).astype(jnp.float32)


def _dice_loss_ref(inputs, target, n_classes, weight=None, softmax=False):
    """Pure-JAX reference mirroring the PyTorch module."""
    if softmax:
        inputs = jax.nn.softmax(inputs, axis=1)
    if weight is None:
        weight = [1.0] * n_classes
    target_oh = jax.nn.one_hot(target, n_classes, axis=1, dtype=jnp.float32)
    loss = 0.0
    for i in range(n_classes):
        score = inputs[:, i].astype(jnp.float32)
        t = target_oh[:, i]
        intersect = jnp.sum(score * t)
        y_sum = jnp.sum(t * t)
        z_sum = jnp.sum(score * score)
        dice = 1.0 - (2.0 * intersect + SMOOTH) / (z_sum + y_sum + SMOOTH)
        loss = loss + dice * weight[i]
    return loss / n_classes


if __name__ == "__main__":
    key = jax.random.PRNGKey(0)
    k1, k2 = jax.random.split(key)

    N, C, H, W = 2, 4, 16, 16
    inputs = jax.random.uniform(k1, (N, C, H, W), dtype=jnp.float32)
    target = jax.random.randint(k2, (N, H, W), 0, C, dtype=jnp.int32)

    loss = dice_loss(inputs, target, n_classes=C, softmax=False)
    loss = jax.block_until_ready(loss)

    ref = _dice_loss_ref(inputs, target, n_classes=C, softmax=False)
    assert jnp.allclose(loss, ref, rtol=1e-4, atol=1e-5), (loss, ref)

    print("KERNEL_OK")
</pallas_src>

<mosaic_0001>
module attributes {stable_mosaic.version = 11 : i64} {
  func.func @_dice_partials_kernel(%arg0: i32, %arg1: i32, %arg2: memref<1x4x256xf32, #tpu.memory_space<vmem>>, %arg3: memref<1x1x256xi32, #tpu.memory_space<vmem>>, %arg4: memref<1x4x3xf32, #tpu.memory_space<vmem>>, %arg5: memref<4x128xf32, #tpu.memory_space<vmem>>, %arg6: memref<4x128xf32, #tpu.memory_space<vmem>>, %arg7: memref<4x128xf32, #tpu.memory_space<vmem>>) attributes {dimension_semantics = [#tpu.dimension_semantics<parallel>, #tpu.dimension_semantics<arbitrary>], iteration_bounds = array<i64: 2, 1>, scalar_prefetch = 0 : i64, scratch_operands = 3 : i64, tpu.core_type = #tpu.core_type<tc>, window_params = [{transform_indices = @transform_0, window_bounds = array<i64: 1, 4, 256>}, {transform_indices = @transform_1, window_bounds = array<i64: 1, 1, 256>}, {transform_indices = @transform_2, window_bounds = array<i64: 1, 4, 3>}]} {
    %c0_i32 = arith.constant 0 : i32
    %0 = arith.cmpi eq, %arg1, %c0_i32 : i32
    %1 = arith.extui %0 : i1 to i32
    %c0_i32_0 = arith.constant 0 : i32
    %2 = arith.cmpi ne, %1, %c0_i32_0 : i32
    scf.if %2 {
      %cst_22 = arith.constant 0.000000e+00 : f32
      %37 = vector.broadcast %cst_22 : f32 to vector<4x128xf32>
      %c0_23 = arith.constant 0 : index
      %c0_24 = arith.constant 0 : index
      %38 = vector.load %arg5[%c0_23, %c0_24] : memref<4x128xf32, #tpu.memory_space<vmem>>, vector<4x128xf32>
      tpu.vector_store %arg5[%c0_23, %c0_24], %37 {strides = array<i32>} : memref<4x128xf32, #tpu.memory_space<vmem>>, vector<4x128xf32>,
      %cst_25 = arith.constant 0.000000e+00 : f32
      %39 = vector.broadcast %cst_25 : f32 to vector<4x128xf32>
      %c0_26 = arith.constant 0 : index
      %c0_27 = arith.constant 0 : index
      %40 = vector.load %arg6[%c0_26, %c0_27] : memref<4x128xf32, #tpu.memory_space<vmem>>, vector<4x128xf32>
      tpu.vector_store %arg6[%c0_26, %c0_27], %39 {strides = array<i32>} : memref<4x128xf32, #tpu.memory_space<vmem>>, vector<4x128xf32>,
      %cst_28 = arith.constant 0.000000e+00 : f32
      %41 = vector.broadcast %cst_28 : f32 to vector<4x128xf32>
      %c0_29 = arith.constant 0 : index
      %c0_30 = arith.constant 0 : index
      %42 = vector.load %arg7[%c0_29, %c0_30] : memref<4x128xf32, #tpu.memory_space<vmem>>, vector<4x128xf32>
      tpu.vector_store %arg7[%c0_29, %c0_30], %41 {strides = array<i32>} : memref<4x128xf32, #tpu.memory_space<vmem>>, vector<4x128xf32>,
    } else {
    }
    %c0 = arith.constant 0 : index
    %c0_1 = arith.constant 0 : index
    %c0_2 = arith.constant 0 : index
    %3 = vector.load %arg2[%c0, %c0_1, %c0_2] : memref<1x4x256xf32, #tpu.memory_space<vmem>>, vector<1x4x256xf32>
    %4 = vector.shape_cast %3 : vector<1x4x256xf32> to vector<4x256xf32>
    %c0_3 = arith.constant 0 : index
    %c0_4 = arith.constant 0 : index
    %c0_5 = arith.constant 0 : index
    %5 = vector.load %arg3[%c0_3, %c0_4, %c0_5] : memref<1x1x256xi32, #tpu.memory_space<vmem>>, vector<1x1x256xi32>
    %6 = vector.shape_cast %5 : vector<1x1x256xi32> to vector<1x256xi32>
    %7 = tpu.iota {dimensions = array<i32: 0>} : vector<4x256xi32>
    %8 = vector.broadcast %6 : vector<1x256xi32> to vector<4x256xi32>
    %9 = arith.cmpi eq, %8, %7 : vector<4x256xi32>
    %cst = arith.constant 0.000000e+00 : f32
    %10 = vector.broadcast %cst : f32 to vector<4x256xf32>
    %11 = arith.select %9, %4, %10 : vector<4x256xi1>, vector<4x256xf32>
    %cst_6 = arith.constant 1.000000e+00 : f32
    %cst_7 = arith.constant 0.000000e+00 : f32
    %12 = vector.broadcast %cst_6 : f32 to vector<4x256xf32>
    %13 = vector.broadcast %cst_7 : f32 to vector<4x256xf32>
    %14 = arith.select %9, %12, %13 : vector<4x256xi1>, vector<4x256xf32>
    %15 = arith.mulf %4, %4 : vector<4x256xf32>
    %16 = vector.extract_strided_slice %11 {offsets = [0, 0], sizes = [4, 128], strides = [1, 1]} : vector<4x256xf32> to vector<4x128xf32>
    %17 = vector.extract_strided_slice %14 {offsets = [0, 0], sizes = [4, 128], strides = [1, 1]} : vector<4x256xf32> to vector<4x128xf32>
    %18 = vector.extract_strided_slice %15 {offsets = [0, 0], sizes = [4, 128], strides = [1, 1]} : vector<4x256xf32> to vector<4x128xf32>
    %19 = vector.extract_strided_slice %11 {offsets = [0, 128], sizes = [4, 128], strides = [1, 1]} : vector<4x256xf32> to vector<4x128xf32>
    %20 = arith.addf %16, %19 : vector<4x128xf32>
    %21 = vector.extract_strided_slice %14 {offsets = [0, 128], sizes = [4, 128], strides = [1, 1]} : vector<4x256xf32> to vector<4x128xf32>
    %22 = arith.addf %17, %21 : vector<4x128xf32>
    %23 = vector.extract_strided_slice %15 {offsets = [0, 128], sizes = [4, 128], strides = [1, 1]} : vector<4x256xf32> to vector<4x128xf32>
    %24 = arith.addf %18, %23 : vector<4x128xf32>
    %c0_8 = arith.constant 0 : index
    %c0_9 = arith.constant 0 : index
    %25 = vector.load %arg5[%c0_8, %c0_9] : memref<4x128xf32, #tpu.memory_space<vmem>>, vector<4x128xf32>
    %26 = arith.addf %25, %20 : vector<4x128xf32>
    %c0_10 = arith.constant 0 : index
    %c0_11 = arith.constant 0 : index
    %27 = vector.load %arg5[%c0_10, %c0_11] : memref<4x128xf32, #tpu.memory_space<vmem>>, vector<4x128xf32>
    tpu.vector_store %arg5[%c0_10, %c0_11], %26 {strides = array<i32>} : memref<4x128xf32, #tpu.memory_space<vmem>>, vector<4x128xf32>,
    %c0_12 = arith.constant 0 : index
    %c0_13 = arith.constant 0 : index
    %28 = vector.load %arg6[%c0_12, %c0_13] : memref<4x128xf32, #tpu.memory_space<vmem>>, vector<4x128xf32>
    %29 = arith.addf %28, %22 : vector<4x128xf32>
    %c0_14 = arith.constant 0 : index
    %c0_15 = arith.constant 0 : index
    %30 = vector.load %arg6[%c0_14, %c0_15] : memref<4x128xf32, #tpu.memory_space<vmem>>, vector<4x128xf32>
    tpu.vector_store %arg6[%c0_14, %c0_15], %29 {strides = array<i32>} : memref<4x128xf32, #tpu.memory_space<vmem>>, vector<4x128xf32>,
    %c0_16 = arith.constant 0 : index
    %c0_17 = arith.constant 0 : index
    %31 = vector.load %arg7[%c0_16, %c0_17] : memref<4x128xf32, #tpu.memory_space<vmem>>, vector<4x128xf32>
    %32 = arith.addf %31, %24 : vector<4x128xf32>
    %c0_18 = arith.constant 0 : index
    %c0_19 = arith.constant 0 : index
    %33 = vector.load %arg7[%c0_18, %c0_19] : memref<4x128xf32, #tpu.memory_space<vmem>>, vector<4x128xf32>
    tpu.vector_store %arg7[%c0_18, %c0_19], %32 {strides = array<i32>} : memref<4x128xf32, #tpu.memory_space<vmem>>, vector<4x128xf32>,
    %c0_i32_20 = arith.constant 0 : i32
    %34 = arith.cmpi eq, %arg1, %c0_i32_20 : i32
    %35 = arith.extui %34 : i1 to i32
    %c0_i32_21 = arith.constant 0 : i32
    %36 = arith.cmpi ne, %35, %c0_i32_21 : i32
    scf.if %36 {
      %c0_22 = arith.constant 0 : index
      %c0_23 = arith.constant 0 : index
      %37 = vector.load %arg5[%c0_22, %c0_23] : memref<4x128xf32, #tpu.memory_space<vmem>>, vector<4x128xf32>
      %cst_24 = arith.constant dense<0.000000e+00> : vector<4xf32>
      %38 = vector.multi_reduction <add>, %37, %cst_24 [1] : vector<4x128xf32> to vector<4xf32>
      %39 = vector.shape_cast %38 : vector<4xf32> to vector<4x1xf32>
      %c0_25 = arith.constant 0 : index
      %c0_26 = arith.constant 0 : index
      %c0_27 = arith.constant 0 : index
      %40 = vector.load %arg4[%c0_25, %c0_26, %c0_27] : memref<1x4x3xf32, #tpu.memory_space<vmem>>, vector<1x4x1xf32>
      %41 = vector.shape_cast %40 : vector<1x4x1xf32> to vector<4x1xf32>
      %42 = vector.shape_cast %39 : vector<4x1xf32> to vector<1x4x1xf32>
      tpu.vector_store %arg4[%c0_25, %c0_26, %c0_27], %42 {strides = array<i32>} : memref<1x4x3xf32, #tpu.memory_space<vmem>>, vector<1x4x1xf32>,
      %c0_28 = arith.constant 0 : index
      %c0_29 = arith.constant 0 : index
      %43 = vector.load %arg6[%c0_28, %c0_29] : memref<4x128xf32, #tpu.memory_space<vmem>>, vector<4x128xf32>
      %cst_30 = arith.constant dense<0.000000e+00> : vector<4xf32>
      %44 = vector.multi_reduction <add>, %43, %cst_30 [1] : vector<4x128xf32> to vector<4xf32>
      %45 = vector.shape_cast %44 : vector<4xf32> to vector<4x1xf32>
      %c0_31 = arith.constant 0 : index
      %c0_32 = arith.constant 0 : index
      %c1 = arith.constant 1 : index
      %46 = vector.load %arg4[%c0_31, %c0_32, %c1] : memref<1x4x3xf32, #tpu.memory_space<vmem>>, vector<1x4x1xf32>
      %47 = vector.shape_cast %46 : vector<1x4x1xf32> to vector<4x1xf32>
      %48 = vector.shape_cast %45 : vector<4x1xf32> to vector<1x4x1xf32>
      tpu.vector_store %arg4[%c0_31, %c0_32, %c1], %48 {strides = array<i32>} : memref<1x4x3xf32, #tpu.memory_space<vmem>>, vector<1x4x1xf32>,
      %c0_33 = arith.constant 0 : index
      %c0_34 = arith.constant 0 : index
      %49 = vector.load %arg7[%c0_33, %c0_34] : memref<4x128xf32, #tpu.memory_space<vmem>>, vector<4x128xf32>
      %cst_35 = arith.constant dense<0.000000e+00> : vector<4xf32>
      %50 = vector.multi_reduction <add>, %49, %cst_35 [1] : vector<4x128xf32> to vector<4xf32>
      %51 = vector.shape_cast %50 : vector<4xf32> to vector<4x1xf32>
      %c0_36 = arith.constant 0 : index
      %c0_37 = arith.constant 0 : index
      %c2 = arith.constant 2 : index
      %52 = vector.load %arg4[%c0_36, %c0_37, %c2] : memref<1x4x3xf32, #tpu.memory_space<vmem>>, vector<1x4x1xf32>
      %53 = vector.shape_cast %52 : vector<1x4x1xf32> to vector<4x1xf32>
      %54 = vector.shape_cast %51 : vector<4x1xf32> to vector<1x4x1xf32>
      tpu.vector_store %arg4[%c0_36, %c0_37, %c2], %54 {strides = array<i32>} : memref<1x4x3xf32, #tpu.memory_space<vmem>>, vector<1x4x1xf32>,
    } else {
    }
    return
  }
  func.func @transform_0(%arg0: i32, %arg1: i32) -> (i32, i32, i32) {
    %c0_i32 = arith.constant 0 : i32
    %c0_i32_0 = arith.constant 0 : i32
    return %arg0, %c0_i32, %arg1 : i32, i32, i32
  }
  func.func @transform_1(%arg0: i32, %arg1: i32) -> (i32, i32, i32) {
    %c0_i32 = arith.constant 0 : i32
    %c0_i32_0 = arith.constant 0 : i32
    return %arg0, %c0_i32, %arg1 : i32, i32, i32
  }
  func.func @transform_2(%arg0: i32, %arg1: i32) -> (i32, i32, i32) {
    %c0_i32 = arith.constant 0 : i32
    %c0_i32_0 = arith.constant 0 : i32
    %c0_i32_1 = arith.constant 0 : i32
    return %arg0, %c0_i32, %c0_i32_0 : i32, i32, i32
  }
}

</mosaic_0001>

<llo_original>
// kernel: tpu_custom_call.1
$region0: #{tpu_custom_call.1}
  #allocation0 [shape = 'u32[]', space=smem, size = 0x4, offset = 0x4, fixed_abs, tag = 'smem constant byte address 0x4 - core index']
  #allocation1 [shape = 'u32[72,128]{1,0:T(1,128)}', space=vmem, size = 0x9000, scoped, tag = 'internal scratch']
  #allocation2 [shape = 'f32[4,128]{1,0:T(4,128)}', space=vmem, size = 0x800, scoped, tag = 'scratch operand']
  #allocation3 [shape = 'f32[4,128]{1,0:T(4,128)}', space=vmem, size = 0x800, scoped, tag = 'scratch operand']
  #allocation4 [shape = 'f32[4,128]{1,0:T(4,128)}', space=vmem, size = 0x800, scoped, tag = 'scratch operand']
  %s0 = inlined_call_operand.hbm [shape: f32[2,4,256], index: 0, kind: input, shape index: {}]
  %s1 = inlined_call_operand.hbm [shape: s32[2,1,256], index: 1, kind: input, shape index: {}]
  %s2 = inlined_call_operand.vmem [shape: f32[2,4,3], index: 2, kind: output, shape index: {}]
  %s3 = sld [smem:[#allocation0]]
  $region57: #{tpu_custom_call.1} parent=0
    _
  %s5 = ssub.s32 1, %s3
  %s6 = scalar_select 0, %s5, %s3
  $region1: #{tpu_custom_call.1} parent=0
    #allocation5 [shape = 'u8[8192]{0}', space=vmem, size = 0x2000, scoped, tag = 'input window, operand 0']
    #allocation6 [shape = 's32[2]{0}', space=sflag, size = 0x8, scoped, tag = 'scoped memory for tpu_custom_call.1']
    #allocation7 [shape = 'u8[2048]{0}', space=vmem, size = 0x800, scoped, tag = 'input window, operand 1']
    #allocation8 [shape = 's32[2]{0}', space=sflag, size = 0x8, scoped, tag = 'scoped memory for tpu_custom_call.1']
    %7 = vsyncpa [#allocation6], 0
    %s8 = scalar_lea.sflag [#allocation6], 1
    %9 = vsyncpa %s8, 0
    %10 = vsyncpa [#allocation8], 0
    %s11 = scalar_lea.sflag [#allocation8], 1
    %12 = vsyncpa %s11, 0
    loop: start=0, step=1, limit=4
    $region2: #{tpu_custom_call.1} parent=1 // loop_pre_header
      _
    $region3: #{tpu_custom_call.1} parent=1 // loop_header
      %s14 = sphi 0, %s18
      %p15 = scmp.ge.s32.totalorder %s14, 4
      %s21 = sphi 0, %s33
      %s22 = sphi 0, %s29
      %s23 = sphi 0, %s21
      %s24 = sphi 0, %s22
      %s25 = sphi 0, %s23
      %s26 = sphi 0, %s24
      %s38 = sphi 0, %s40
      %s41 = sphi 0, %s38
      %s42 = sphi 0, %s41
      %s58 = sphi 0, %s42
      %s66 = sphi 0, %s68
      %s69 = sphi 0, %s66
      %s70 = sphi 0, %s69
      %s86 = sphi 0, %s70
      %s92 = sphi 0, %s94
      %s95 = sphi 0, %s92
      %s96 = sphi 0, %s95
      %s112 = sphi 0, %s96
    $region4: #{tpu_custom_call.1} parent=1 // loop_header_branch
      %17 = sbr.rel (%p15) target = $region8
    $region5: #{tpu_custom_call.1} parent=1 // loop_body
      %s19 = ssub.s32 %s14, 1
      %s20 = ssub.s32 %s14, 2
      %s27 = sadd.s32 1, %s22
      %p28 = scmp.ge.s32.totalorder %s27, 1
      %s29 = scalar_select %p28, 0, %s27
      %s30 = sadd.s32 1, %s21
      %s31 = scalar_select %p28, %s30, %s21
      %p32 = scmp.ge.s32.totalorder %s31, 2
      %s33 = scalar_select %p32, 0, %s31
      %s34 = ssub.s32 %s21, %s33
      %s35 = ssub.s32 %s22, %s29
      %s36 = sor.u32 %s34, %s35
      %p37 = scmp.eq.s32.totalorder %s36, 0
      %s39 = sadd.s32 %s38, 1
      %s40 = scalar_select %p37, %s38, %s39
      %p43 = pneg %p37
      %p44 = scmp.eq.s32.totalorder %s14, 1
      %p45 = por %p43, %p44
      %p46 = scmp.ne.s32.totalorder %s38, %s41
      %p47 = scmp.eq.s32.totalorder %s14, 0
      %p48 = por %p46, %p47
      %p49 = scmp.ne.s32.totalorder %s38, %s41
      %p50 = scmp.eq.s32.totalorder %s19, 1
      %p51 = por %p49, %p50
      %p52 = scmp.ne.s32.totalorder %s41, %s42
      %p53 = scmp.eq.s32.totalorder %s19, 0
      %p54 = por %p52, %p53
      %p55 = scmp.ne.s32.totalorder %s41, %s42
      %p56 = scmp.eq.s32.totalorder %s20, 1
      %p57 = por %p55, %p56
      %p59 = scmp.ne.s32.totalorder %s42, %s58
      %p60 = scmp.eq.s32.totalorder %s20, 0
      %p61 = por %p59, %p60
      %s62 = ssub.s32 %s21, %s33
      %s63 = ssub.s32 %s22, %s29
      %s64 = sor.u32 %s62, %s63
      %p65 = scmp.eq.s32.totalorder %s64, 0
      %s67 = sadd.s32 %s66, 1
      %s68 = scalar_select %p65, %s66, %s67
      %p71 = pneg %p65
      %p72 = scmp.eq.s32.totalorder %s14, 1
      %p73 = por %p71, %p72
      %p74 = scmp.ne.s32.totalorder %s66, %s69
      %p75 = scmp.eq.s32.totalorder %s14, 0
      %p76 = por %p74, %p75
      %p77 = scmp.ne.s32.totalorder %s66, %s69
      %p78 = scmp.eq.s32.totalorder %s19, 1
      %p79 = por %p77, %p78
      %p80 = scmp.ne.s32.totalorder %s69, %s70
      %p81 = scmp.eq.s32.totalorder %s19, 0
      %p82 = por %p80, %p81
      %p83 = scmp.ne.s32.totalorder %s69, %s70
      %p84 = scmp.eq.s32.totalorder %s20, 1
      %p85 = por %p83, %p84
      %p87 = scmp.ne.s32.totalorder %s70, %s86
      %p88 = scmp.eq.s32.totalorder %s20, 0
      %p89 = por %p87, %p88
      %s90 = ssub.s32 %s21, %s33
      %p91 = scmp.eq.s32.totalorder %s90, 0
      %s93 = sadd.s32 %s92, 1
      %s94 = scalar_select %p91, %s92, %s93
      %p97 = pneg %p91
      %p98 = scmp.eq.s32.totalorder %s14, 1
      %p99 = por %p97, %p98
      %p100 = scmp.ne.s32.totalorder %s92, %s95
      %p101 = scmp.eq.s32.totalorder %s14, 0
      %p102 = por %p100, %p101
      %p103 = scmp.ne.s32.totalorder %s92, %s95
      %p104 = scmp.eq.s32.totalorder %s19, 1
      %p105 = por %p103, %p104
      %p106 = scmp.ne.s32.totalorder %s95, %s96
      %p107 = scmp.eq.s32.totalorder %s19, 0
      %p108 = por %p106, %p107
      %p109 = scmp.ne.s32.totalorder %s95, %s96
      %p110 = scmp.eq.s32.totalorder %s20, 1
      %p111 = por %p109, %p110
      %p113 = scmp.ne.s32.totalorder %s96, %s112
      %p114 = scmp.eq.s32.totalorder %s20, 0
      %p115 = por %p113, %p114
      %p116 = scmp.le.s32.totalorder 1, %s14
      %p117 = scmp.lt.s32.totalorder %s14, 3
      %p118 = pnand %p116, %p117
      %p119 = pneg %p118
      // Predicated region
      $region9: #{tpu_custom_call.1} parent=5 // pred_check
        _
      $region10: #{tpu_custom_call.1} parent=5 // pred_check_branch
        %121 = sbr.rel (%p118) target = $region12
      $region11: #{tpu_custom_call.1} parent=5 // pred_region
        %s122 = ssub.s32 %s14, 1
      $region12: #{tpu_custom_call.1} parent=5 // pred_fallthru
        _
      %p123 = scmp.lt.s32.totalorder %s14, 2
      // Predicated region
      $region13: #{tpu_custom_call.1} parent=5 // pred_check
        %p124 = pneg %p123
      $region14: #{tpu_custom_call.1} parent=5 // pred_check_branch
        %126 = sbr.rel (%p124) target = $region16
      $region15: #{tpu_custom_call.1} parent=5 // pred_region
        // Predicated region
        $region17: #{tpu_custom_call.1} parent=15 // pred_check
          %p127 = pneg %p48
        $region18: #{tpu_custom_call.1} parent=15 // pred_check_branch
          %129 = sbr.rel (%p127) target = $region20
        $region19: #{tpu_custom_call.1} parent=15 // pred_region
          %s130 = sand.u32 %s38, 1
          %s131 = scalar_lea.sflag [#allocation6], %s130
          %s132 = sand.u32 %s38, 1
          %s133 = smul.addr %s132, 8
          %s134 = scalar_lea.vmem [#allocation5], %s133
          %s135 = smul.u32 2, %s22
          %137 = vsyncadd %s131, 0
          %s138 = smul.addr %s21, 2
          %s139 = sadd.s32 %s135, %s138
          %s140 = smul.addr %s139, 4
          %s141 = scalar_lea.hbm %s0, %s140
          %s143 = sshll.u32 %s141, 4
          %s144 = int_to_ptr.hbm [resolvable:$true] %s143
          %s145 = sshll.u32 %s134, 4
          %s146 = int_to_ptr.vmem [resolvable:$true] %s145
          %148 = dma.hbm_to_vmem [thread:$0]  %s144, 128, %s146, %s131
        $region20: #{tpu_custom_call.1} parent=15 // pred_fallthru
          _
        // Predicated region
        $region21: #{tpu_custom_call.1} parent=15 // pred_check
          %p149 = pneg %p76
        $region22: #{tpu_custom_call.1} parent=15 // pred_check_branch
          %151 = sbr.rel (%p149) target = $region24
        $region23: #{tpu_custom_call.1} parent=15 // pred_region
          %s152 = sand.u32 %s66, 1
          %s153 = scalar_lea.sflag [#allocation8], %s152
          %s154 = sand.u32 %s66, 1
          %s155 = smul.addr %s154, 2
          %s156 = scalar_lea.vmem [#allocation7], %s155
          %s157 = smul.u32 2, %s22
          %159 = vsyncadd %s153, 0
          %s160 = smul.addr %s21, 2
          %s161 = sadd.s32 %s157, %s160
          %s162 = scalar_lea.hbm %s1, %s161
          %s164 = sshll.u32 %s162, 4
          %s165 = int_to_ptr.hbm [resolvable:$true] %s164
          %s166 = sshll.u32 %s156, 4
          %s167 = int_to_ptr.vmem [resolvable:$true] %s166
          %169 = dma.hbm_to_vmem [thread:$0]  %s165, 32, %s167, %s153
        $region24: #{tpu_custom_call.1} parent=15 // pred_fallthru
          _
      $region16: #{tpu_custom_call.1} parent=5 // pred_fallthru
        _
      %p170 = scmp.le.s32.totalorder 1, %s14
      %p171 = scmp.lt.s32.totalorder %s14, 3
      %p172 = pnand %p170, %p171
      %p173 = pneg %p172
      // Predicated region
      $region25: #{tpu_custom_call.1} parent=5 // pred_check
        _
      $region26: #{tpu_custom_call.1} parent=5 // pred_check_branch
        %175 = sbr.rel (%p172) target = $region28
      $region27: #{tpu_custom_call.1} parent=5 // pred_region
        %s176 = ssub.s32 %s14, 1
        %s177 = sand.u32 %s41, 1
        %s178 = scalar_lea.sflag [#allocation6], %s177
        %s179 = sand.u32 %s41, 1
        %s180 = smul.addr %s179, 8
        %s181 = scalar_lea.vmem [#allocation5], %s180
        // Predicated region
        $region29: #{tpu_custom_call.1} parent=27 // pred_check
          %p182 = pneg %p54
        $region30: #{tpu_custom_call.1} parent=27 // pred_check_branch
          %184 = sbr.rel (%p182) target = $region32
        $region31: #{tpu_custom_call.1} parent=27 // pred_region
          %186 = dma.done %s178, 128
        $region32: #{tpu_custom_call.1} parent=27 // pred_fallthru
          _
        %s187 = sand.u32 %s69, 1
        %s188 = scalar_lea.sflag [#allocation8], %s187
        %s189 = sand.u32 %s69, 1
        %s190 = smul.addr %s189, 2
        %s191 = scalar_lea.vmem [#allocation7], %s190
        // Predicated region
        $region33: #{tpu_custom_call.1} parent=27 // pred_check
          %p192 = pneg %p82
        $region34: #{tpu_custom_call.1} parent=27 // pred_check_branch
          %194 = sbr.rel (%p192) target = $region36
        $region35: #{tpu_custom_call.1} parent=27 // pred_region
          %196 = dma.done %s188, 32
        $region36: #{tpu_custom_call.1} parent=27 // pred_fallthru
          _
        %s197 = sand.u32 %s41, 1
        %s198 = scalar_lea.sflag [#allocation6], %s197
        %s199 = sand.u32 %s41, 1
        %s200 = smul.addr %s199, 8
        %s201 = scalar_lea.vmem [#allocation5], %s200
        %p202 = pneg %p54
        %p203 = pneg %p51
        %s204 = sand.u32 %s69, 1
        %s205 = scalar_lea.sflag [#allocation8], %s204
        %s206 = sand.u32 %s69, 1
        %s207 = smul.addr %s206, 2
        %s208 = scalar_lea.vmem [#allocation7], %s207
        %p209 = pneg %p82
        %p210 = pneg %p79
        %p211 = pneg %p108
        %p212 = pneg %p105
        %p213 = scmp.lt.s32.totalorder %s23, 1
        %s214 = scalar_select %p213, %s23, 1
        %s215 = smul.addr %s214, 4
        %s216 = scalar_lea.vmem %s2, %s215
        %s217 = smul.u32 2, %s24
        %s218 = smul.u32 2, %s24
        %p219 = scmp.lt.s32.totalorder %s23, 1
        %s220 = scalar_select %p219, %s23, 1
        %s221 = smul.addr %s220, 4
        %s222 = scalar_lea.vmem %s2, %s221
        %p223 = scmp.eq.s32.totalorder %s24, 0
        // Predicated region
        $region37: #{tpu_custom_call.1} parent=27 // pred_check
          %p224 = pneg %p223
        $region38: #{tpu_custom_call.1} parent=27 // pred_check_branch
          %226 = sbr.rel (%p224) target = $region40
        $region39: #{tpu_custom_call.1} parent=27 // pred_region
          %227 = vst [vmem:[#allocation2] sm:$0xf] 0.0
          %228 = vst [vmem:[#allocation3] sm:$0xf] 0.0
          %229 = vst [vmem:[#allocation4] sm:$0xf] 0.0
        $region40: #{tpu_custom_call.1} parent=27 // pred_fallthru
          _
        %v230 = vld [vmem:[%s181] sm:$0xff]
        %v231 = vld [vmem:[%s191] sm:$0x3]
        %v232 = vlaneseq
        %v233 = vshrl.u32 %v232, 7
        %v234 = vperm.slane %v231, 0
        %v235 = vperm.slane %v231, 1
        %vm236 = vcmp.eq.s32.totalorder %v234, %v233
        %vm237 = vcmp.eq.s32.totalorder %v235, %v233
        %239 = vst [vmem:[#allocation1] ss:$2 sm:$0xff] %v230
        %v240 = vld.sshfl [vmem:[#allocation1] sm:$0xff pattern:$0x75316420]
        %v241 = vld.sshfl [vmem:[#allocation1 + $0x8] sm:$0xff pattern:$0x75316420]
        %v244 = vsel %vm236, %v240, 0.0
        %v245 = vsel %vm237, %v241, 0.0
        %v246 = vsel %vm236, 1.0, 0.0
        %v247 = vsel %vm237, 1.0, 0.0
        %v248 = vmul.f32 %v230, %v230
        %v249 = vadd.f32 %v244, %v245
        %v250 = vadd.f32 %v246, %v247
        %v252 = vrot.slane %v248, 4
        %v254 = vadd.f32 %v248, %v252
        %v255 = vld [vmem:[#allocation2] sm:$0xf]
        %v256 = vadd.f32 %v255, %v249
        %257 = vst [vmem:[#allocation2] sm:$0xf] %v256
        %v258 = vld [vmem:[#allocation3] sm:$0xf]
        %v259 = vadd.f32 %v258, %v250
        %260 = vst [vmem:[#allocation3] sm:$0xf] %v259
        %v261 = vld [vmem:[#allocation4] sm:$0xf]
        %v262 = vadd.f32 %v261, %v254
        %263 = vst [vmem:[#allocation4] sm:$0xf] %v262
        // Predicated region
        $region41: #{tpu_custom_call.1} parent=27 // pred_check
          %p264 = pneg %p223
        $region42: #{tpu_custom_call.1} parent=27 // pred_check_branch
          %266 = sbr.rel (%p264) target = $region44
        $region43: #{tpu_custom_call.1} parent=27 // pred_region
          %v267 = vld [vmem:[#allocation2] sm:$0xf]
          %vm268 = vcmask 1043456
          %v269 = vsel %vm268, %v267, 0.0
          %270 = vadd.xlane.f32.xlu0 %v269
          %v271 = vpop.xlane.xlu0 %270
          %vm272 = vcmask 3072
          %273 = vst.msk [vmem:[%s222] sm:$0xf] %vm272, %v271
          %v274 = vld [vmem:[#allocation3] sm:$0xf]
          %v275 = vsel %vm268, %v274, 0.0
          %276 = vadd.xlane.f32.xlu0 %v275
          %v277 = vpop.xlane.xlu0 %276
          %vm278 = vcmask 11272
          %279 = vst.msk [vmem:[%s222] sm:$0xf] %vm278, %v277
          %v280 = vld [vmem:[#allocation4] sm:$0xf]
          %v281 = vsel %vm268, %v280, 0.0
          %282 = vadd.xlane.f32.xlu0 %v281
          %v283 = vpop.xlane.xlu0 %282
          %vm284 = vcmask 19472
          %285 = vst.msk [vmem:[%s222] sm:$0xf] %vm284, %v283
        $region44: #{tpu_custom_call.1} parent=27 // pred_fallthru
          _
        %p286 = scmp.lt.s32.totalorder %s23, 1
        %s287 = scalar_select %p286, %s23, 1
        %s288 = smul.addr %s287, 4
        %s289 = scalar_lea.vmem %s2, %s288
        // Predicated region
        $region45: #{tpu_custom_call.1} parent=27 // pred_check
          %p290 = pneg %p105
        $region46: #{tpu_custom_call.1} parent=27 // pred_check_branch
          %292 = sbr.rel (%p290) target = $region48
        $region47: #{tpu_custom_call.1} parent=27 // pred_region
          _
        $region48: #{tpu_custom_call.1} parent=27 // pred_fallthru
          _
      $region28: #{tpu_custom_call.1} parent=5 // pred_fallthru
        _
      %p293 = scmp.le.s32.totalorder 2, %s14
      // Predicated region
      $region49: #{tpu_custom_call.1} parent=5 // pred_check
        %p294 = pneg %p293
      $region50: #{tpu_custom_call.1} parent=5 // pred_check_branch
        %296 = sbr.rel (%p294) target = $region52
      $region51: #{tpu_custom_call.1} parent=5 // pred_region
        %s297 = ssub.s32 %s14, 2
        // Predicated region
        $region53: #{tpu_custom_call.1} parent=51 // pred_check
          %p298 = pneg %p111
        $region54: #{tpu_custom_call.1} parent=51 // pred_check_branch
          %300 = sbr.rel (%p298) target = $region56
        $region55: #{tpu_custom_call.1} parent=51 // pred_region
          %p301 = scmp.lt.s32.totalorder %s25, 1
          %s302 = scalar_select %p301, %s25, 1
          %s303 = smul.addr %s302, 4
          %s304 = scalar_lea.vmem %s2, %s303
        $region56: #{tpu_custom_call.1} parent=51 // pred_fallthru
          _
      $region52: #{tpu_custom_call.1} parent=5 // pred_fallthru
        _
    $region6: #{tpu_custom_call.1} parent=1 // loop_footer
      %s18 = sadd.s32 1, %s14
    $region7: #{tpu_custom_call.1} parent=1 // loop_footer_branch
      %13 = sbr.rel target = $region3
    $region8: #{tpu_custom_call.1} parent=1 // loop_exit
      _
    %305 = vsyncpa [#allocation6], 1
    %s306 = scalar_lea.sflag [#allocation6], 1
    %307 = vsyncpa %s306, 1
    %308 = vsyncpa [#allocation8], 1
    %s309 = scalar_lea.sflag [#allocation8], 1
    %310 = vsyncpa %s309, 1

</llo_original>
